<compile_context>
chip_gen: v5e
topology: v5e:2x2
jax: 0.10.0
libtpu: 0.0.40
codegen_flags: <defaults>
</compile_context>

<pallas_src>
import jax
import jax.numpy as jnp
from jax import lax
from jax.experimental import pallas as pl
from jax.experimental.pallas import tpu as pltpu


def _logreg_kernel(x_ref, w_ref, o_ref):
    # x_ref: (TB, input_dim)       -- streamed batch tile
    # w_ref: (out_dim, input_dim)  -- resident (same block every grid step)
    # o_ref: (out_dim, TB)         -- lane-dense output tile
    o_ref[...] = lax.dot_general(
        w_ref[...],
        x_ref[...],
        dimension_numbers=(((1,), (1,)), ((), ())),  # contract input_dim: w @ x^T
        preferred_element_type=jnp.float32,
    ).astype(o_ref.dtype)


def _ceil_to(x, m):
    return -(-x // m) * m


def _vmem_info():
    """Returns (physical VMEM bytes, byte budget for this kernel's working set)."""
    phys = 64 * 1024 * 1024  # conservative fallback (v7x per-TensorCore VMEM)
    try:
        info = pltpu.get_tpu_info()
        phys = int(getattr(info, "vmem_capacity_bytes", phys)) or phys
    except Exception:
        pass
    # Half of physical, capped at 48 MiB: multi-MiB double-buffered tiles on
    # v5e/v6e (128 MiB physical) while staying well inside v7x's 64 MiB per TC.
    return phys, min(phys // 2, 48 * 1024 * 1024)


def _choose_block_batch(batch, input_dim, itemsize, budget_bytes):
    """Largest legal batch tile whose double-buffered working set fits the budget.

    The output block is (out_dim, TB) with TB on the lane axis, so TB must be a
    multiple of 128 (or equal to the full batch).
    """
    # VMEM bytes per batch row: double-buffered x tile + double-buffered output
    # tile (out_dim rows pad to 8 sublanes, <=4-byte elements).
    per_row = 2 * input_dim * itemsize + 2 * 8 * 4
    tb = int(budget_bytes * 0.85) // per_row  # headroom for weight + compiler scratch

    if tb >= batch:
        if batch >= 256:
            # Split in two so a v7x chip can shard the grid across both TCs.
            return _ceil_to((batch + 1) // 2, 128)
        return batch  # single block; block dims == array dims is always legal

    tb = (tb // 128) * 128
    if tb < 128:
        # TODO(synk): for very large input_dim, add a K grid axis ("arbitrary",
        # placed last) with an f32 accumulator instead of forcing an oversized tile.
        return batch if batch <= 128 else 128
    if batch >= 256:
        tb = min(tb, _ceil_to((batch + 1) // 2, 128))
    return tb


def logistic_regression_forward(x, weight, *, block_batch=None):
    """Forward pass of LogisticRegression: x @ weight.T (no bias, raw logits).

    x:      (batch, input_dim)
    weight: (out_dim=2, input_dim)  (PyTorch nn.Linear convention)
    returns (batch, out_dim)
    """
    batch, input_dim = x.shape
    out_dim = weight.shape[0]
    itemsize = jnp.dtype(x.dtype).itemsize

    phys_vmem, budget = _vmem_info()

    if block_batch is None:
        tb = _choose_block_batch(batch, input_dim, itemsize, budget)
    else:
        tb = int(block_batch)
        if tb >= batch:
            tb = batch
        else:
            tb = max(128, (tb // 128) * 128)  # keep the lane-dense output block aligned
            tb = min(tb, batch)

    num_tiles = pl.cdiv(batch, tb)

    # Explicit scoped-VMEM limit: cover the double-buffered working set with margin,
    # never exceeding physical VMEM.
    est = (2 * tb * input_dim * itemsize            # x tiles (double-buffered)
           + 2 * 8 * tb * 4                         # output tiles, sublane-padded
           + 2 * 8 * _ceil_to(input_dim, 128) * 4)  # resident weight copies
    vmem_limit = min(phys_vmem - (8 << 20), max(budget, est + (4 << 20)))

    out = pl.pallas_call(
        _logreg_kernel,
        out_shape=jax.ShapeDtypeStruct((out_dim, batch), x.dtype),
        grid_spec=pl.GridSpec(
            grid=(num_tiles,),
            in_specs=[
                pl.BlockSpec((tb, input_dim), lambda i: (i, 0)),       # streamed x
                pl.BlockSpec((out_dim, input_dim), lambda i: (0, 0)),  # resident weight
            ],
            out_specs=pl.BlockSpec((out_dim, tb), lambda i: (0, i)),   # lane-dense out
        ),
        compiler_params=pltpu.CompilerParams(
            # Batch tiles are independent -> megacore-shardable on v7x.
            dimension_semantics=("parallel",),
            vmem_limit_bytes=int(vmem_limit),
        ),
    )(x, weight)

    # (out_dim, batch) -> (batch, out_dim); tiny array, negligible HBM traffic.
    return out.T


if __name__ == "__main__":
    key = jax.random.PRNGKey(0)
    kx, kw = jax.random.split(key)

    batch, input_dim = 512, 128
    x = jax.random.normal(kx, (batch, input_dim), dtype=jnp.float32)
    # Deterministic init mimicking nn.Linear default (uniform(-1/sqrt(fan_in), +)).
    bound = 1.0 / (input_dim ** 0.5)
    weight = jax.random.uniform(
        kw, (2, input_dim), dtype=jnp.float32, minval=-bound, maxval=bound
    )

    ref = x @ weight.T

    # 1) Auto-sized tiles (>= 2 grid steps at this batch, so v7x can use both TCs).
    out_auto = logistic_regression_forward(x, weight)
    jax.block_until_ready(out_auto)
    assert out_auto.shape == (batch, 2)
    assert jnp.allclose(out_auto, ref, atol=1e-5, rtol=1e-5)

    # 2) Explicit 128-row tiles -> 4 grid steps.
    out_tiled = logistic_regression_forward(x, weight, block_batch=128)
    jax.block_until_ready(out_tiled)
    assert jnp.allclose(out_tiled, ref, atol=1e-5, rtol=1e-5)

    # 3) Ragged batch (300 rows, 128-row tiles) -> exercises the unpadded partial
    #    edge block (no wrapper-side jnp.pad copy).
    x_odd = x[:300]
    out_odd = logistic_regression_forward(x_odd, weight, block_batch=128)
    jax.block_until_ready(out_odd)
    assert out_odd.shape == (300, 2)
    assert jnp.allclose(out_odd, ref[:300], atol=1e-5, rtol=1e-5)

    print("KERNEL_OK")
</pallas_src>

<mosaic_0001>
module attributes {stable_mosaic.version = 11 : i64} {
  func.func @_logreg_kernel(%arg0: i32, %arg1: memref<256x128xf32, #tpu.memory_space<vmem>>, %arg2: memref<2x128xf32, #tpu.memory_space<vmem>>, %arg3: memref<2x256xf32, #tpu.memory_space<vmem>>) attributes {dimension_semantics = [#tpu.dimension_semantics<parallel>], iteration_bounds = array<i64: 2>, scalar_prefetch = 0 : i64, scratch_operands = 0 : i64, tpu.core_type = #tpu.core_type<tc>, window_params = [{transform_indices = @transform_0, window_bounds = array<i64: 256, 128>}, {pipeline_mode = #tpu.pipeline_mode<synchronous>, transform_indices = @transform_1, window_bounds = array<i64: 2, 128>}, {transform_indices = @transform_2, window_bounds = array<i64: 2, 256>}]} {
    %c0 = arith.constant 0 : index
    %c0_0 = arith.constant 0 : index
    %0 = vector.load %arg2[%c0, %c0_0] : memref<2x128xf32, #tpu.memory_space<vmem>>, vector<2x128xf32>
    %c0_1 = arith.constant 0 : index
    %c0_2 = arith.constant 0 : index
    %1 = vector.load %arg1[%c0_1, %c0_2] : memref<256x128xf32, #tpu.memory_space<vmem>>, vector<256x128xf32>
    %cst = arith.constant dense<0.000000e+00> : vector<2x256xf32>
    %2 = tpu.matmul %0, %1, %cst {dimension_numbers = #tpu.dot_dimension_numbers<[1], [1], [0], [0], [0, 0, 1, 0], [], []>} : vector<2x128xf32>, vector<256x128xf32>, vector<2x256xf32> -> vector<2x256xf32>
    %c0_3 = arith.constant 0 : index
    %c0_4 = arith.constant 0 : index
    %3 = vector.load %arg3[%c0_3, %c0_4] : memref<2x256xf32, #tpu.memory_space<vmem>>, vector<2x256xf32>
    tpu.vector_store %arg3[%c0_3, %c0_4], %2 {strides = array<i32>} : memref<2x256xf32, #tpu.memory_space<vmem>>, vector<2x256xf32>,
    return
  }
  func.func @transform_0(%arg0: i32) -> (i32, i32) {
    %c0_i32 = arith.constant 0 : i32
    %c0_i32_0 = arith.constant 0 : i32
    return %arg0, %c0_i32 : i32, i32
  }
  func.func @transform_1(%arg0: i32) -> (i32, i32) {
    %c0_i32 = arith.constant 0 : i32
    %c0_i32_0 = arith.constant 0 : i32
    %c0_i32_1 = arith.constant 0 : i32
    return %c0_i32, %c0_i32_0 : i32, i32
  }
  func.func @transform_2(%arg0: i32) -> (i32, i32) {
    %c0_i32 = arith.constant 0 : i32
    %c0_i32_0 = arith.constant 0 : i32
    return %c0_i32, %arg0 : i32, i32
  }
}

</mosaic_0001>

<llo_original>
// kernel: tpu_custom_call.1
$region0: #{tpu_custom_call.1}
  #allocation0 [shape = 'u32[]', space=smem, size = 0x4, offset = 0x4, fixed_abs, tag = 'smem constant byte address 0x4 - core index']
  #allocation1 [shape = 'u32[72,128]{1,0:T(1,128)}', space=vmem, size = 0x9000, scoped, tag = 'internal scratch']
  %s0 = inlined_call_operand.hbm [shape: f32[512,128], index: 0, kind: input, shape index: {}]
  %s1 = inlined_call_operand.hbm [shape: f32[2,128], index: 1, kind: input, shape index: {}]
  %s2 = inlined_call_operand.hbm [shape: f32[2,512], index: 2, kind: output, shape index: {}]
  %s3 = sld [smem:[#allocation0]]
  $region49: #{tpu_custom_call.1} parent=0
    _
  %s5 = ssub.s32 1, %s3
  %s6 = scalar_select 0, %s5, %s3
  $region1: #{tpu_custom_call.1} parent=0
    #allocation2 [shape = 'u8[262144]{0}', space=vmem, size = 0x40000, scoped, tag = 'input window, operand 0']
    #allocation3 [shape = 's32[2]{0}', space=sflag, size = 0x8, scoped, tag = 'scoped memory for tpu_custom_call.1']
    #allocation4 [shape = 's32[2]{0}', space=sflag, size = 0x8, scoped, tag = 'scoped memory for tpu_custom_call.1']
    #allocation5 [shape = 'u8[1024]{0}', space=vmem, size = 0x400, scoped, tag = 'input window, operand 1, single buffered']
    #allocation6 [shape = 's32[1]{0}', space=sflag, size = 0x4, scoped, tag = 'scoped memory for tpu_custom_call.1']
    #allocation7 [shape = 'u8[4096]{0}', space=vmem, size = 0x1000, scoped, tag = 'output window, operand 0']
    %7 = vsyncpa [#allocation3], 0
    %s8 = scalar_lea.sflag [#allocation3], 1
    %9 = vsyncpa %s8, 0
    %10 = vsyncpa [#allocation6], 0
    %11 = vsyncpa [#allocation4], 0
    %s12 = scalar_lea.sflag [#allocation4], 1
    %13 = vsyncpa %s12, 0
    loop: start=0, step=1, limit=4
    $region2: #{tpu_custom_call.1} parent=1 // loop_pre_header
      _
    $region3: #{tpu_custom_call.1} parent=1 // loop_header
      %s15 = sphi 0, %s19
      %p16 = scmp.ge.s32.totalorder %s15, 4
      %s25 = sphi 0, %s27
      %s28 = sphi 0, %s25
      %s29 = sphi 0, %s28
      %s45 = sphi 0, %s29
      %s49 = sphi 0, %s49
      %s51 = sphi 0, %s49
      %s52 = sphi 0, %s51
      %s66 = sphi 0, %s52
      %s72 = sphi 0, %s74
      %s75 = sphi 0, %s72
      %s76 = sphi 0, %s75
      %s92 = sphi 0, %s76
    $region4: #{tpu_custom_call.1} parent=1 // loop_header_branch
      %18 = sbr.rel (%p16) target = $region8
    $region5: #{tpu_custom_call.1} parent=1 // loop_body
      %s20 = ssub.s32 %s15, 1
      %s21 = ssub.s32 %s15, 2
      %s22 = sadd.s32 %s15, 1
      %s23 = ssub.s32 %s15, %s22
      %p24 = scmp.eq.s32.totalorder %s23, 0
      %s26 = sadd.s32 %s25, 1
      %s27 = scalar_select %p24, %s25, %s26
      %p30 = pneg %p24
      %p31 = scmp.eq.s32.totalorder %s15, 1
      %p32 = por %p30, %p31
      %p33 = scmp.ne.s32.totalorder %s25, %s28
      %p34 = scmp.eq.s32.totalorder %s15, 0
      %p35 = por %p33, %p34
      %p36 = scmp.ne.s32.totalorder %s25, %s28
      %p37 = scmp.eq.s32.totalorder %s20, 1
      %p38 = por %p36, %p37
      %p39 = scmp.ne.s32.totalorder %s28, %s29
      %p40 = scmp.eq.s32.totalorder %s20, 0
      %p41 = por %p39, %p40
      %p42 = scmp.ne.s32.totalorder %s28, %s29
      %p43 = scmp.eq.s32.totalorder %s21, 1
      %p44 = por %p42, %p43
      %p46 = scmp.ne.s32.totalorder %s29, %s45
      %p47 = scmp.eq.s32.totalorder %s21, 0
      %p48 = por %p46, %p47
      %s50 = sadd.s32 %s49, 1
      %p53 = scmp.eq.s32.totalorder %s15, 1
      %p54 = scmp.ne.s32.totalorder %s49, %s51
      %p55 = scmp.eq.s32.totalorder %s15, 0
      %p56 = por %p54, %p55
      %p57 = scmp.ne.s32.totalorder %s49, %s51
      %p58 = scmp.eq.s32.totalorder %s20, 1
      %p59 = por %p57, %p58
      %p60 = scmp.ne.s32.totalorder %s51, %s52
      %p61 = scmp.eq.s32.totalorder %s20, 0
      %p62 = por %p60, %p61
      %p63 = scmp.ne.s32.totalorder %s51, %s52
      %p64 = scmp.eq.s32.totalorder %s21, 1
      %p65 = por %p63, %p64
      %p67 = scmp.ne.s32.totalorder %s52, %s66
      %p68 = scmp.eq.s32.totalorder %s21, 0
      %p69 = por %p67, %p68
      %s70 = ssub.s32 %s15, %s22
      %p71 = scmp.eq.s32.totalorder %s70, 0
      %s73 = sadd.s32 %s72, 1
      %s74 = scalar_select %p71, %s72, %s73
      %p77 = pneg %p71
      %p78 = scmp.eq.s32.totalorder %s15, 1
      %p79 = por %p77, %p78
      %p80 = scmp.ne.s32.totalorder %s72, %s75
      %p81 = scmp.eq.s32.totalorder %s15, 0
      %p82 = por %p80, %p81
      %p83 = scmp.ne.s32.totalorder %s72, %s75
      %p84 = scmp.eq.s32.totalorder %s20, 1
      %p85 = por %p83, %p84
      %p86 = scmp.ne.s32.totalorder %s75, %s76
      %p87 = scmp.eq.s32.totalorder %s20, 0
      %p88 = por %p86, %p87
      %p89 = scmp.ne.s32.totalorder %s75, %s76
      %p90 = scmp.eq.s32.totalorder %s21, 1
      %p91 = por %p89, %p90
      %p93 = scmp.ne.s32.totalorder %s76, %s92
      %p94 = scmp.eq.s32.totalorder %s21, 0
      %p95 = por %p93, %p94
      %p96 = scmp.le.s32.totalorder 1, %s15
      %p97 = scmp.lt.s32.totalorder %s15, 3
      %p98 = pnand %p96, %p97
      %p99 = pneg %p98
      // Predicated region
      $region9: #{tpu_custom_call.1} parent=5 // pred_check
        _
      $region10: #{tpu_custom_call.1} parent=5 // pred_check_branch
        %101 = sbr.rel (%p98) target = $region12
      $region11: #{tpu_custom_call.1} parent=5 // pred_region
        %s102 = ssub.s32 %s15, 1
        // Predicated region
        $region13: #{tpu_custom_call.1} parent=11 // pred_check
          %p103 = pneg %p62
        $region14: #{tpu_custom_call.1} parent=11 // pred_check_branch
          %105 = sbr.rel (%p103) target = $region16
        $region15: #{tpu_custom_call.1} parent=11 // pred_region
          %107 = vsyncadd [#allocation6], 0
          %s109 = sshll.u32 %s1, 4
          %s110 = int_to_ptr.hbm [resolvable:$true] %s109
          %s111 = sshll.u32 [#allocation5], 4
          %s112 = int_to_ptr.vmem [resolvable:$true] %s111
          %114 = dma.hbm_to_vmem [thread:$0]  %s110, 32, %s112, [#allocation6]
        $region16: #{tpu_custom_call.1} parent=11 // pred_fallthru
          _
      $region12: #{tpu_custom_call.1} parent=5 // pred_fallthru
        _
      %p115 = scmp.lt.s32.totalorder %s15, 2
      // Predicated region
      $region17: #{tpu_custom_call.1} parent=5 // pred_check
        %p116 = pneg %p115
      $region18: #{tpu_custom_call.1} parent=5 // pred_check_branch
        %118 = sbr.rel (%p116) target = $region20
      $region19: #{tpu_custom_call.1} parent=5 // pred_region
        // Predicated region
        $region21: #{tpu_custom_call.1} parent=19 // pred_check
          %p119 = pneg %p35
        $region22: #{tpu_custom_call.1} parent=19 // pred_check_branch
          %121 = sbr.rel (%p119) target = $region24
        $region23: #{tpu_custom_call.1} parent=19 // pred_region
          %s122 = sand.u32 %s25, 1
          %s123 = scalar_lea.sflag [#allocation3], %s122
          %s124 = sand.u32 %s25, 1
          %s125 = smul.addr %s124, 256
          %s126 = scalar_lea.vmem [#allocation2], %s125
          %s127 = smul.u32 32, %s15
          %129 = vsyncadd %s123, 0
          %s130 = smul.addr %s127, 8
          %s131 = scalar_lea.hbm %s0, %s130
          %s132 = sshll.u32 %s131, 4
          %s133 = int_to_ptr.hbm [resolvable:$true] %s132
          %s134 = sshll.u32 %s126, 4
          %s135 = int_to_ptr.vmem [resolvable:$true] %s134
          %140 = dma.hbm_to_vmem [thread:$0]  %s133, 4096, %s135, %s123, 128, 128, 8
        $region24: #{tpu_custom_call.1} parent=19 // pred_fallthru
          _
      $region20: #{tpu_custom_call.1} parent=5 // pred_fallthru
        _
      %p141 = scmp.le.s32.totalorder 1, %s15
      %p142 = scmp.lt.s32.totalorder %s15, 3
      %p143 = pnand %p141, %p142
      %p144 = pneg %p143
      // Predicated region
      $region25: #{tpu_custom_call.1} parent=5 // pred_check
        _
      $region26: #{tpu_custom_call.1} parent=5 // pred_check_branch
        %146 = sbr.rel (%p143) target = $region28
      $region27: #{tpu_custom_call.1} parent=5 // pred_region
        %s147 = ssub.s32 %s15, 1
        %s148 = sand.u32 %s28, 1
        %s149 = scalar_lea.sflag [#allocation3], %s148
        %s150 = sand.u32 %s28, 1
        %s151 = smul.addr %s150, 256
        %s152 = scalar_lea.vmem [#allocation2], %s151
        // Predicated region
        $region29: #{tpu_custom_call.1} parent=27 // pred_check
          %p153 = pneg %p41
        $region30: #{tpu_custom_call.1} parent=27 // pred_check_branch
          %155 = sbr.rel (%p153) target = $region32
        $region31: #{tpu_custom_call.1} parent=27 // pred_region
          %157 = dma.done %s149, 4096
        $region32: #{tpu_custom_call.1} parent=27 // pred_fallthru
          _
        // Predicated region
        $region33: #{tpu_custom_call.1} parent=27 // pred_check
          %p158 = pneg %p62
        $region34: #{tpu_custom_call.1} parent=27 // pred_check_branch
          %160 = sbr.rel (%p158) target = $region36
        $region35: #{tpu_custom_call.1} parent=27 // pred_region
          %162 = dma.done [#allocation6], 32
        $region36: #{tpu_custom_call.1} parent=27 // pred_fallthru
          _
        %s163 = sand.u32 %s28, 1
        %s164 = scalar_lea.sflag [#allocation3], %s163
        %s165 = sand.u32 %s28, 1
        %s166 = smul.addr %s165, 256
        %s167 = scalar_lea.vmem [#allocation2], %s166
        %p168 = pneg %p41
        %p169 = pneg %p38
        %p170 = pneg %p62
        %p171 = pneg %p59
        %p172 = pneg %p88
        %p173 = pneg %p85
        %s174 = sand.u32 %s75, 1
        %s175 = scalar_lea.sflag [#allocation4], %s174
        %s176 = sand.u32 %s75, 1
        %s177 = smul.addr %s176, 4
        %s178 = scalar_lea.vmem [#allocation7], %s177
        %s179 = smul.u32 32, %s20
        %s180 = smul.u32 2, %s20
        %v181 = vld [vmem:[#allocation5] sm:$0x3]
        %v182 = vld [vmem:[%s152] sm:$0xff]
        %v183 = vld [vmem:[%s152 + $0x8] sm:$0xff]
        %v184 = vld [vmem:[%s152 + $0x10] sm:$0xff]
        %v185 = vld [vmem:[%s152 + $0x18] sm:$0xff]
        %v186 = vld [vmem:[%s152 + $0x20] sm:$0xff]
        %v187 = vld [vmem:[%s152 + $0x28] sm:$0xff]
        %v188 = vld [vmem:[%s152 + $0x30] sm:$0xff]
        %v189 = vld [vmem:[%s152 + $0x38] sm:$0xff]
        %v190 = vld [vmem:[%s152 + $0x40] sm:$0xff]
        %v191 = vld [vmem:[%s152 + $0x48] sm:$0xff]
        %v192 = vld [vmem:[%s152 + $0x50] sm:$0xff]
        %v193 = vld [vmem:[%s152 + $0x58] sm:$0xff]
        %v194 = vld [vmem:[%s152 + $0x60] sm:$0xff]
        %v195 = vld [vmem:[%s152 + $0x68] sm:$0xff]
        %v196 = vld [vmem:[%s152 + $0x70] sm:$0xff]
        %v197 = vld [vmem:[%s152 + $0x78] sm:$0xff]
        %v198 = vld [vmem:[%s152 + $0x80] sm:$0xff]
        %v199 = vld [vmem:[%s152 + $0x88] sm:$0xff]
        %v200 = vld [vmem:[%s152 + $0x90] sm:$0xff]
        %v201 = vld [vmem:[%s152 + $0x98] sm:$0xff]
        %v202 = vld [vmem:[%s152 + $0xa0] sm:$0xff]
        %v203 = vld [vmem:[%s152 + $0xa8] sm:$0xff]
        %v204 = vld [vmem:[%s152 + $0xb0] sm:$0xff]
        %v205 = vld [vmem:[%s152 + $0xb8] sm:$0xff]
        %v206 = vld [vmem:[%s152 + $0xc0] sm:$0xff]
        %v207 = vld [vmem:[%s152 + $0xc8] sm:$0xff]
        %v208 = vld [vmem:[%s152 + $0xd0] sm:$0xff]
        %v209 = vld [vmem:[%s152 + $0xd8] sm:$0xff]
        %v210 = vld [vmem:[%s152 + $0xe0] sm:$0xff]
        %v211 = vld [vmem:[%s152 + $0xe8] sm:$0xff]
        %v212 = vld [vmem:[%s152 + $0xf0] sm:$0xff]
        %v213 = vld [vmem:[%s152 + $0xf8] sm:$0xff]
        %214 = vmatpush.xpose.msra.mxu0 %v197
        %215 = vmatpush.xpose.msra.mxu0 %v196
        %216 = vmatpush.xpose.msra.mxu0 %v195
        %217 = vmatpush.xpose.msra.mxu0 %v194
        %218 = vmatpush.xpose.msra.mxu0 %v193
        %219 = vmatpush.xpose.msra.mxu0 %v192
        %220 = vmatpush.xpose.msra.mxu0 %v191
        %221 = vmatpush.xpose.msra.mxu0 %v190
        %222 = vmatpush.xpose.msra.mxu0 %v189
        %223 = vmatpush.xpose.msra.mxu0 %v188
        %224 = vmatpush.xpose.msra.mxu0 %v187
        %225 = vmatpush.xpose.msra.mxu0 %v186
        %226 = vmatpush.xpose.msra.mxu0 %v185
        %227 = vmatpush.xpose.msra.mxu0 %v184
        %228 = vmatpush.xpose.msra.mxu0 %v183
        %229 = vmatpush.xpose.msra.mxu0 %v182
        %230 = vmatmul.f32.gmra.mxu0 %v181
        %v231 = vpop.f32.mrf.mxu0
        %v232 = vadd.f32 0.0, %v231
        %233 = vdwg.mxu0
        %234 = vmatpush.xpose.msra.mxu0 %v213
        %235 = vmatpush.xpose.msra.mxu0 %v212
        %236 = vmatpush.xpose.msra.mxu0 %v211
        %237 = vmatpush.xpose.msra.mxu0 %v210
        %238 = vmatpush.xpose.msra.mxu0 %v209
        %239 = vmatpush.xpose.msra.mxu0 %v208
        %240 = vmatpush.xpose.msra.mxu0 %v207
        %241 = vmatpush.xpose.msra.mxu0 %v206
        %242 = vmatpush.xpose.msra.mxu0 %v205
        %243 = vmatpush.xpose.msra.mxu0 %v204
        %244 = vmatpush.xpose.msra.mxu0 %v203
        %245 = vmatpush.xpose.msra.mxu0 %v202
        %246 = vmatpush.xpose.msra.mxu0 %v201
        %247 = vmatpush.xpose.msra.mxu0 %v200
        %248 = vmatpush.xpose.msra.mxu0 %v199
        %249 = vmatpush.xpose.msra.mxu0 %v198
        %250 = vmatmul.f32.gmra.mxu0 %v181
        %v251 = vpop.f32.mrf.mxu0
        %v252 = vadd.f32 0.0, %v251
        %253 = vdwg.mxu0
        %v256 = vrot.slane %v252, 6
        %vm257 = vcmask 1041408
        %v258 = vsel %vm257, %v232, %v256
        %260 = vst [vmem:[%s178] sm:$0xf] %v258
        %s261 = sand.u32 %s75, 1
        %s262 = scalar_lea.sflag [#allocation4], %s261
        %s263 = sand.u32 %s75, 1
        %s264 = smul.addr %s263, 4
        %s265 = scalar_lea.vmem [#allocation7], %s264
        // Predicated region
        $region37: #{tpu_custom_call.1} parent=27 // pred_check
          %p266 = pneg %p85
        $region38: #{tpu_custom_call.1} parent=27 // pred_check_branch
          %268 = sbr.rel (%p266) target = $region40
        $region39: #{tpu_custom_call.1} parent=27 // pred_region
          %s269 = smul.u32 2, %s20
          %271 = vsyncadd %s262, 0
          %s272 = smul.addr %s269, 2
          %s273 = scalar_lea.hbm %s2, %s272
          %s275 = sshll.u32 %s265, 4
          %s276 = int_to_ptr.vmem [resolvable:$true] %s275
          %s277 = sshll.u32 %s273, 4
          %s278 = int_to_ptr.hbm [resolvable:$true] %s277
          %280 = dma.vmem_to_hbm [thread:$0]  %s276, 64, %s278, %s262
        $region40: #{tpu_custom_call.1} parent=27 // pred_fallthru
          _
      $region28: #{tpu_custom_call.1} parent=5 // pred_fallthru
        _
      %p281 = scmp.le.s32.totalorder 2, %s15
      // Predicated region
      $region41: #{tpu_custom_call.1} parent=5 // pred_check
        %p282 = pneg %p281
      $region42: #{tpu_custom_call.1} parent=5 // pred_check_branch
        %284 = sbr.rel (%p282) target = $region44
      $region43: #{tpu_custom_call.1} parent=5 // pred_region
        %s285 = ssub.s32 %s15, 2
        // Predicated region
        $region45: #{tpu_custom_call.1} parent=43 // pred_check
          %p286 = pneg %p91
        $region46: #{tpu_custom_call.1} parent=43 // pred_check_branch
          %288 = sbr.rel (%p286) target = $region48
        $region47: #{tpu_custom_call.1} parent=43 // pred_region
          %s289 = sand.u32 %s76, 1
          %s290 = scalar_lea.sflag [#allocation4], %s289
          %s291 = sand.u32 %s76, 1
          %s292 = smul.addr %s291, 4
          %s293 = scalar_lea.vmem [#allocation7], %s292
          %295 = dma.done %s290, 64
        $region48: #{tpu_custom_call.1} parent=43 // pred_fallthru
          _
      $region44: #{tpu_custom_call.1} parent=5 // pred_fallthru
        _
    $region6: #{tpu_custom_call.1} parent=1 // loop_footer
      %s19 = sadd.s32 1, %s15
    $region7: #{tpu_custom_call.1} parent=1 // loop_footer_branch
      %14 = sbr.rel target = $region3
    $region8: #{tpu_custom_call.1} parent=1 // loop_exit
      _
    %296 = vsyncpa [#allocation3], 1
    %s297 = scalar_lea.sflag [#allocation3], 1
    %298 = vsyncpa %s297, 1
    %299 = vsyncpa [#allocation6], 1
    %300 = vsyncpa [#allocation4], 1
    %s301 = scalar_lea.sflag [#allocation4], 1
    %302 = vsyncpa %s301, 1

</llo_original>
